<compile_context>
chip_gen: v7x
topology: tpu7x:2x2x1
jax: 0.10.0
libtpu: 0.0.40
codegen_flags: <defaults>
</compile_context>

<pallas_src>
import jax
import jax.numpy as jnp
import numpy as np
from jax import lax
from jax.experimental import pallas as pl
from jax.experimental.pallas import tpu as pltpu


def prediction_head_kernel(x_ref, w_ref, b_ref, o_ref):
    """One (batch-tile, K-tile) grid step of  y = x @ W.T + b.

    x_ref : (tb, tk)   input activation tile
    w_ref : (O,  tk)   native-layout weight tile (lane-dense rows)
    b_ref : (1,  O)    bias
    o_ref : (tb, O)    f32 output tile; resident across the K grid axis and
                       used directly as the accumulator (init = bias at k==0).
    """
    k = pl.program_id(1)

    @pl.when(k == 0)
    def _():
        o_ref[...] = jnp.broadcast_to(b_ref[...], o_ref.shape).astype(o_ref.dtype)

    # Contract the shared K dimension: (tb, tk) x (O, tk) -> (tb, O).
    o_ref[...] += lax.dot_general(
        x_ref[...], w_ref[...],
        dimension_numbers=(((1,), (1,)), ((), ())),
        preferred_element_type=jnp.float32,
    ).astype(o_ref.dtype)


def _round_up(x, m):
    return ((x + m - 1) // m) * m


def _choose_tb(b_padded):
    """Batch tile: multiple of 8 that divides b_padded, capped at 256.
    For b_padded >= 16, cap at ~b/2 so grid[0] >= 2 (both v7x TensorCores)."""
    tb = min(256, b_padded)
    if b_padded >= 16:
        tb = min(tb, max(8, (b_padded // 2) // 8 * 8))
    tb = max(8, (tb // 8) * 8)
    while b_padded % tb != 0:
        tb -= 8
    return tb


def prediction_head_forward(x, weight, bias):
    """x: (B, S, H).  weight: (O, S*H) [native nn.Linear layout].  bias: (O,).

    Returns (B, O) in x.dtype, computed with float32 accumulation.
    """
    B = x.shape[0]
    K = int(np.prod(x.shape[1:]))
    O = weight.shape[0]

    x_flat = x.reshape(B, K).astype(jnp.float32)
    w = weight.astype(jnp.float32)          # kept as (O, K): no transpose in hot path
    b2 = bias.reshape(1, O).astype(jnp.float32)

    # ---- K tiling: lane-aligned, zero-padded (zeros don't change the dot) ----
    TK_CAP = 2048                           # ~2 MiB f32 x-block at tb=256 (roofline sweet spot)
    k_aligned = _round_up(K, 128)
    tk = k_aligned if k_aligned <= TK_CAP else TK_CAP
    k_padded = _round_up(K, tk)
    if k_padded != K:
        # TODO(synk): in production hoist this zero-padding of the weight to init.
        x_flat = jnp.pad(x_flat, ((0, 0), (0, k_padded - K)))
        w = jnp.pad(w, ((0, 0), (0, k_padded - K)))

    # ---- Batch tiling: sublane-aligned, >= 2 tiles when B is large enough ----
    if B <= 8:
        b_padded, tb = B, B                 # full-extent block is always legal
    else:
        b_padded = _round_up(B, 8)
        tb = _choose_tb(b_padded)
    if b_padded != B:
        x_flat = jnp.pad(x_flat, ((0, b_padded - B), (0, 0)))

    grid = (b_padded // tb, k_padded // tk)

    out = pl.pallas_call(
        prediction_head_kernel,
        out_shape=jax.ShapeDtypeStruct((b_padded, O), jnp.float32),
        grid_spec=pltpu.PrefetchScalarGridSpec(
            num_scalar_prefetch=0,
            grid=grid,
            in_specs=[
                pl.BlockSpec((tb, tk), lambda i, k: (i, k)),   # x tile (lane-dense)
                pl.BlockSpec((O, tk), lambda i, k: (0, k)),    # W tile (native layout, lane-dense)
                pl.BlockSpec((1, O), lambda i, k: (0, 0)),     # bias
            ],
            out_specs=pl.BlockSpec((tb, O), lambda i, k: (i, 0)),  # resident accumulator
        ),
        compiler_params=pltpu.CompilerParams(
            dimension_semantics=("parallel", "arbitrary"),
            vmem_limit_bytes=32 * 1024 * 1024,   # explicit budget; fits v5e/v6e/v7x scoped VMEM
        ),
    )(x_flat, w, b2)

    if b_padded != B:
        out = out[:B]
    return out.astype(x.dtype)


def prediction_head_reference(x, weight, bias):
    B = x.shape[0]
    x_flat = x.reshape(B, -1)
    return x_flat @ weight.T + bias


def init_params(key, input_dim, output_dim):
    kw, kb = jax.random.split(key)
    bound = float(1.0 / np.sqrt(input_dim))  # nn.Linear default init range
    weight = jax.random.uniform(kw, (output_dim, input_dim), jnp.float32, -bound, bound)
    bias = jax.random.uniform(kb, (output_dim,), jnp.float32, -bound, bound)
    return weight, bias


if __name__ == "__main__":
    # Small shapes consistent with the module's forward: x is (B, seq_len, hidden).
    B, SEQ_LEN, HIDDEN = 2, 8, 32
    INPUT_DIM = SEQ_LEN * HIDDEN          # 256
    OUTPUT_DIM = 12

    key = jax.random.PRNGKey(0)
    kx, kp = jax.random.split(key)

    x = jax.random.normal(kx, (B, SEQ_LEN, HIDDEN), jnp.float32)
    weight, bias = init_params(kp, INPUT_DIM, OUTPUT_DIM)

    out = prediction_head_forward(x, weight, bias)
    out = jax.block_until_ready(out)

    ref = prediction_head_reference(x, weight, bias)
    np.testing.assert_allclose(np.asarray(out), np.asarray(ref), rtol=1e-5, atol=1e-5)
    assert out.shape == (B, OUTPUT_DIM)

    print("KERNEL_OK")
</pallas_src>

<mosaic_0001>
module attributes {stable_mosaic.version = 11 : i64} {
  func.func @prediction_head_kernel(%arg0: i32, %arg1: i32, %arg2: memref<2x256xf32, #tpu.memory_space<vmem>>, %arg3: memref<12x256xf32, #tpu.memory_space<vmem>>, %arg4: memref<1x12xf32, #tpu.memory_space<vmem>>, %arg5: memref<2x12xf32, #tpu.memory_space<vmem>>) attributes {dimension_semantics = [#tpu.dimension_semantics<parallel>, #tpu.dimension_semantics<arbitrary>], iteration_bounds = array<i64: 1, 1>, scalar_prefetch = 0 : i64, scratch_operands = 0 : i64, tpu.core_type = #tpu.core_type<tc>, window_params = [{transform_indices = @transform_0, window_bounds = array<i64: 2, 256>}, {transform_indices = @transform_1, window_bounds = array<i64: 12, 256>}, {pipeline_mode = #tpu.pipeline_mode<synchronous>, transform_indices = @transform_2, window_bounds = array<i64: 1, 12>}, {transform_indices = @transform_3, window_bounds = array<i64: 2, 12>}]} {
    %c0_i32 = arith.constant 0 : i32
    %0 = arith.cmpi eq, %arg1, %c0_i32 : i32
    %1 = arith.extui %0 : i1 to i32
    %c0_i32_0 = arith.constant 0 : i32
    %2 = arith.cmpi ne, %1, %c0_i32_0 : i32
    scf.if %2 {
      %c0_8 = arith.constant 0 : index
      %c0_9 = arith.constant 0 : index
      %9 = vector.load %arg4[%c0_8, %c0_9] : memref<1x12xf32, #tpu.memory_space<vmem>>, vector<1x12xf32>
      %10 = vector.shape_cast %9 : vector<1x12xf32> to vector<1x12xf32>
      %11 = vector.broadcast %10 : vector<1x12xf32> to vector<2x12xf32>
      %c0_10 = arith.constant 0 : index
      %c0_11 = arith.constant 0 : index
      %12 = vector.load %arg5[%c0_10, %c0_11] : memref<2x12xf32, #tpu.memory_space<vmem>>, vector<2x12xf32>
      tpu.vector_store %arg5[%c0_10, %c0_11], %11 {strides = array<i32>} : memref<2x12xf32, #tpu.memory_space<vmem>>, vector<2x12xf32>,
    } else {
    }
    %c0 = arith.constant 0 : index
    %c0_1 = arith.constant 0 : index
    %3 = vector.load %arg5[%c0, %c0_1] : memref<2x12xf32, #tpu.memory_space<vmem>>, vector<2x12xf32>
    %c0_2 = arith.constant 0 : index
    %c0_3 = arith.constant 0 : index
    %4 = vector.load %arg2[%c0_2, %c0_3] : memref<2x256xf32, #tpu.memory_space<vmem>>, vector<2x256xf32>
    %c0_4 = arith.constant 0 : index
    %c0_5 = arith.constant 0 : index
    %5 = vector.load %arg3[%c0_4, %c0_5] : memref<12x256xf32, #tpu.memory_space<vmem>>, vector<12x256xf32>
    %cst = arith.constant dense<0.000000e+00> : vector<2x12xf32>
    %6 = tpu.matmul %4, %5, %cst {dimension_numbers = #tpu.dot_dimension_numbers<[1], [1], [0], [0], [0, 0, 1, 0], [], []>} : vector<2x256xf32>, vector<12x256xf32>, vector<2x12xf32> -> vector<2x12xf32>
    %7 = arith.addf %3, %6 : vector<2x12xf32>
    %c0_6 = arith.constant 0 : index
    %c0_7 = arith.constant 0 : index
    %8 = vector.load %arg5[%c0_6, %c0_7] : memref<2x12xf32, #tpu.memory_space<vmem>>, vector<2x12xf32>
    tpu.vector_store %arg5[%c0_6, %c0_7], %7 {strides = array<i32>} : memref<2x12xf32, #tpu.memory_space<vmem>>, vector<2x12xf32>,
    return
  }
  func.func @transform_0(%arg0: i32, %arg1: i32) -> (i32, i32) {
    %c0_i32 = arith.constant 0 : i32
    return %arg0, %arg1 : i32, i32
  }
  func.func @transform_1(%arg0: i32, %arg1: i32) -> (i32, i32) {
    %c0_i32 = arith.constant 0 : i32
    %c0_i32_0 = arith.constant 0 : i32
    return %c0_i32, %arg1 : i32, i32
  }
  func.func @transform_2(%arg0: i32, %arg1: i32) -> (i32, i32) {
    %c0_i32 = arith.constant 0 : i32
    %c0_i32_0 = arith.constant 0 : i32
    %c0_i32_1 = arith.constant 0 : i32
    return %c0_i32, %c0_i32_0 : i32, i32
  }
  func.func @transform_3(%arg0: i32, %arg1: i32) -> (i32, i32) {
    %c0_i32 = arith.constant 0 : i32
    %c0_i32_0 = arith.constant 0 : i32
    return %arg0, %c0_i32 : i32, i32
  }
}

</mosaic_0001>

<llo_original>
// kernel: tpu_custom_call.1
$region0: #{tpu_custom_call.1}
  #allocation0 [shape = 'u32[]', space=smem, size = 0x4, offset = 0x4, fixed_abs, tag = 'smem constant byte address 0x4 - core index']
  #allocation1 [shape = 'u32[144,128]{1,0:T(1,128)}', space=vmem, size = 0x12000, scoped, tag = 'internal scratch']
  %s0 = inlined_call_operand.hbm [shape: f32[2,256], index: 0, kind: input, shape index: {}]
  %s1 = inlined_call_operand.hbm [shape: f32[12,256], index: 1, kind: input, shape index: {}]
  %s2 = inlined_call_operand.vmem [shape: f32[1,12], index: 2, kind: input, shape index: {}]
  %s3 = inlined_call_operand.hbm [shape: f32[2,12], index: 3, kind: output, shape index: {}]
  %s4 = sld [smem:[#allocation0]]
  $region34: #{tpu_custom_call.1} parent=0
    _
  %s6 = ssub.s32 1, %s4
  %s7 = scalar_select 0, %s6, %s4
  $region1: #{tpu_custom_call.1} parent=0
    #allocation2 [shape = 'u8[2048]{0}', space=vmem, size = 0x800, scoped, tag = 'input window, operand 0, single buffered']
    #allocation3 [shape = 's32[1]{0}', space=sflag, size = 0x4, scoped, tag = 'scoped memory for tpu_custom_call.1']
    #allocation4 [shape = 's32[1]{0}', space=sflag, size = 0x4, scoped, tag = 'scoped memory for tpu_custom_call.1']
    #allocation5 [shape = 'u8[16384]{0}', space=vmem, size = 0x4000, scoped, tag = 'input window, operand 1, single buffered']
    #allocation6 [shape = 's32[1]{0}', space=sflag, size = 0x4, scoped, tag = 'scoped memory for tpu_custom_call.1']
    #allocation7 [shape = 'u8[1024]{0}', space=vmem, size = 0x400, scoped, tag = 'output window, operand 0, single buffered']
    %8 = vsyncpa [#allocation3], 0
    %9 = vsyncpa [#allocation6], 0
    %10 = vsyncpa [#allocation4], 0
    // Predicated region
    $region2: #{tpu_custom_call.1} parent=1 // pred_check
      _
    $region3: #{tpu_custom_call.1} parent=1 // pred_check_branch
      %12 = sbr.rel (0) target = $region5
    $region4: #{tpu_custom_call.1} parent=1 // pred_region
      %s14 = ssub.s32 64, 64
      %15 = vsyncadd [#allocation3], %s14
      %s17 = sshll.u32 [#allocation2], 4
      %s18 = int_to_ptr.vmem [resolvable:$true] %s17
      %20 = dma.hbm_to_vmem [thread:$0]  %s0, 64, %s18, [#allocation3]
    $region5: #{tpu_custom_call.1} parent=1 // pred_fallthru
      _
    // Predicated region
    $region6: #{tpu_custom_call.1} parent=1 // pred_check
      _
    $region7: #{tpu_custom_call.1} parent=1 // pred_check_branch
      %22 = sbr.rel (0) target = $region9
    $region8: #{tpu_custom_call.1} parent=1 // pred_region
      %s24 = ssub.s32 512, 512
      %25 = vsyncadd [#allocation6], %s24
      %s26 = sshll.u32 [#allocation5], 4
      %s27 = int_to_ptr.vmem [resolvable:$true] %s26
      %32 = dma.hbm_to_vmem [thread:$0]  %s1, 512, %s27, [#allocation6], 256, 256, 16
    $region9: #{tpu_custom_call.1} parent=1 // pred_fallthru
      _
    // Predicated region
    $region10: #{tpu_custom_call.1} parent=1 // pred_check
      _
    $region11: #{tpu_custom_call.1} parent=1 // pred_check_branch
      %34 = sbr.rel (0) target = $region13
    $region12: #{tpu_custom_call.1} parent=1 // pred_region
      _
    $region13: #{tpu_custom_call.1} parent=1 // pred_fallthru
      _
    // Predicated region
    $region14: #{tpu_custom_call.1} parent=1 // pred_check
      _
    $region15: #{tpu_custom_call.1} parent=1 // pred_check_branch
      %36 = sbr.rel (0) target = $region17
    $region16: #{tpu_custom_call.1} parent=1 // pred_region
      %37 = dma.done [#allocation3], 64
    $region17: #{tpu_custom_call.1} parent=1 // pred_fallthru
      _
    // Predicated region
    $region18: #{tpu_custom_call.1} parent=1 // pred_check
      _
    $region19: #{tpu_custom_call.1} parent=1 // pred_check_branch
      %39 = sbr.rel (0) target = $region21
    $region20: #{tpu_custom_call.1} parent=1 // pred_region
      %40 = dma.done [#allocation6], 512
    $region21: #{tpu_custom_call.1} parent=1 // pred_fallthru
      _
    %p41 = scmp.eq.s32.totalorder 0, 0
    // Predicated region
    $region22: #{tpu_custom_call.1} parent=1 // pred_check
      %p42 = pneg %p41
    $region23: #{tpu_custom_call.1} parent=1 // pred_check_branch
      %44 = sbr.rel (%p42) target = $region25
    $region24: #{tpu_custom_call.1} parent=1 // pred_region
      %v45 = vld [vmem:[%s2] sm:$0x1]
      %v47 = vlaneseq
      %v48 = vshrl.u32 %v47, 7
      %v49 = vsub.s32 0, %v48
      %v50 = vrot.slane %v45, %v49
      %vm52 = vcmask 91136
      %53 = vst.msk [vmem:[#allocation7] sm:$0x3] %vm52, %v50
    $region25: #{tpu_custom_call.1} parent=1 // pred_fallthru
      _
    %v54 = vld [vmem:[#allocation7] sm:$0x3]
    %v55 = vld [vmem:[#allocation2] sm:$0xf]
    %v56 = vld [vmem:[#allocation5] sm:$0xff]
    %v57 = vld [vmem:[#allocation5 + $0x8] sm:$0xff]
    %v58 = vld [vmem:[#allocation5 + $0x10] sm:$0xf]
    %v59 = vld [vmem:[#allocation5 + $0x18] sm:$0xf]
    %v62 = vunpack.c.l.s4 1983009808
    %v63 = vunpack.c.0.s8 %v62
    %v64 = vlaneseq
    %v65 = vshrl.u32 %v64, 7
    %v66 = vsub.s32 %v63, %v65
    %v67 = vrot.slane %v55, %v66
    %v68 = vcombine.high %v67, %v67
    %71 = vmatprep.subr.mxu0 %v57
    %72 = vmatpush1.xpose.msra.mxu0 %v56
    %73 = vmatprep.subr.mxu0 %v59
    %74 = vmatpush1.xpose.msra.mxu0 %v58
    %75 = vmatprep.subr.mxu0 0.0
    %76 = vmatpush1.xpose.msra.mxu0 0.0
    %77 = vmatprep.subr.mxu0 0.0
    %78 = vmatpush1.xpose.msra.mxu0 0.0
    %79 = vmatprep.subr.mxu0 0.0
    %80 = vmatpush1.xpose.msra.mxu0 0.0
    %81 = vmatprep.subr.mxu0 0.0
    %82 = vmatpush1.xpose.msra.mxu0 0.0
    %83 = vmatprep.subr.mxu0 0.0
    %84 = vmatpush1.xpose.msra.mxu0 0.0
    %85 = vmatprep.subr.mxu0 0.0
    %86 = vmatpush1.xpose.msra.mxu0 0.0
    %87 = vmatprep.subr.mxu0 0.0
    %88 = vmatpush1.xpose.msra.mxu0 0.0
    %89 = vmatprep.subr.mxu0 0.0
    %90 = vmatpush1.xpose.msra.mxu0 0.0
    %91 = vmatprep.subr.mxu0 0.0
    %92 = vmatpush1.xpose.msra.mxu0 0.0
    %93 = vmatprep.subr.mxu0 0.0
    %94 = vmatpush1.xpose.msra.mxu0 0.0
    %95 = vmatprep.subr.mxu0 0.0
    %96 = vmatpush1.xpose.msra.mxu0 0.0
    %97 = vmatprep.subr.mxu0 0.0
    %98 = vmatpush1.xpose.msra.mxu0 0.0
    %99 = vmatprep.subr.mxu0 0.0
    %100 = vmatpush1.xpose.msra.mxu0 0.0
    %101 = vmatprep.subr.mxu0 0.0
    %102 = vmatpush1.xpose.msra.mxu0 0.0
    %103 = vmatprep.subr.mxu0 0.0
    %104 = vmatpush1.xpose.msra.mxu0 0.0
    %105 = vmatprep.subr.mxu0 0.0
    %106 = vmatpush1.xpose.msra.mxu0 0.0
    %107 = vmatprep.subr.mxu0 0.0
    %108 = vmatpush1.xpose.msra.mxu0 0.0
    %109 = vmatprep.subr.mxu0 0.0
    %110 = vmatpush1.xpose.msra.mxu0 0.0
    %111 = vmatprep.subr.mxu0 0.0
    %112 = vmatpush1.xpose.msra.mxu0 0.0
    %113 = vmatprep.subr.mxu0 0.0
    %114 = vmatpush1.xpose.msra.mxu0 0.0
    %115 = vmatprep.subr.mxu0 0.0
    %116 = vmatpush1.xpose.msra.mxu0 0.0
    %117 = vmatprep.subr.mxu0 0.0
    %118 = vmatpush1.xpose.msra.mxu0 0.0
    %119 = vmatprep.subr.mxu0 0.0
    %120 = vmatpush1.xpose.msra.mxu0 0.0
    %121 = vmatprep.subr.mxu0 0.0
    %122 = vmatpush1.xpose.msra.mxu0 0.0
    %123 = vmatprep.subr.mxu0 0.0
    %124 = vmatpush1.xpose.msra.mxu0 0.0
    %125 = vmatprep.subr.mxu0 0.0
    %126 = vmatpush1.xpose.msra.mxu0 0.0
    %127 = vmatprep.subr.mxu0 0.0
    %128 = vmatpush1.xpose.msra.mxu0 0.0
    %129 = vmatprep.subr.mxu0 0.0
    %130 = vmatpush1.xpose.msra.mxu0 0.0
    %131 = vmatprep.subr.mxu0 0.0
    %132 = vmatpush1.xpose.msra.mxu0 0.0
    %133 = vmatprep.subr.mxu0 0.0
    %134 = vmatpush1.xpose.msra.mxu0 0.0
    %135 = vmatprep.mubr.f32.mxu0 %v68
    %136 = vmatmul.mubr.f32.gmra.mrb[0].mxu0 %v67
    %v137 = vpop.f32.mrb[0].mxu0
    %v138 = vadd.f32 0.0, %v137
    %v139 = vpop.f32.mrb[0].mxu0
    %140 = vdwg.mxu0
    %v141 = vadd.f32 %v54, %v138
    %vm142 = vcmask 91136
    %143 = vst.msk [vmem:[#allocation7] sm:$0x3] %vm142, %v141
    // Predicated region
    $region26: #{tpu_custom_call.1} parent=1 // pred_check
      _
    $region27: #{tpu_custom_call.1} parent=1 // pred_check_branch
      %145 = sbr.rel (0) target = $region29
    $region28: #{tpu_custom_call.1} parent=1 // pred_region
      %s147 = ssub.s32 32, 32
      %148 = vsyncadd [#allocation4], %s147
      %s150 = sshll.u32 [#allocation7], 4
      %s151 = int_to_ptr.vmem [resolvable:$true] %s150
      %153 = dma.vmem_to_hbm [thread:$0]  %s151, 32, %s3, [#allocation4]
    $region29: #{tpu_custom_call.1} parent=1 // pred_fallthru
      _
    // Predicated region
    $region30: #{tpu_custom_call.1} parent=1 // pred_check
      _
    $region31: #{tpu_custom_call.1} parent=1 // pred_check_branch
      %155 = sbr.rel (0) target = $region33
    $region32: #{tpu_custom_call.1} parent=1 // pred_region
      %156 = dma.done [#allocation4], 32
    $region33: #{tpu_custom_call.1} parent=1 // pred_fallthru
      _
    %157 = vsyncpa [#allocation3], 1
    %158 = vsyncpa [#allocation6], 1
    %159 = vsyncpa [#allocation4], 1

</llo_original>
